<compile_context>
chip_gen: v5e
topology: v5e:2x2
jax: 0.10.0
libtpu: 0.0.40
codegen_flags: <defaults>
</compile_context>

<pallas_src>
import functools

import numpy as np
import jax
import jax.numpy as jnp
from jax.experimental import pallas as pl
from jax.experimental.pallas import tpu as pltpu

_EPS = 1e-5


# --------------------------------------------------------------------------- Pallas kernels

def _conv_kernel(*refs, kh_kw, dil, N, th, Wo, act, has_res):
    """Fused stride-1 conv, batch folded into the matmul M dimension.

    Grid = (Cout tiles, output-row tiles).  The whole padded NHWC batch is resident in
    VMEM; weight tiles stay resident across the inner row axis.  The KHxKW taps are
    unrolled as bf16 MXU matmuls into an f32 accumulator of (N*th*Wo, tn); BN affine
    (+bias), optional residual add and ReLU/PReLU are applied before the single store.
    """
    if has_res:
        x_ref, w_ref, sc_ref, sh_ref, al_ref, res_ref, o_ref = refs
    else:
        x_ref, w_ref, sc_ref, sh_ref, al_ref, o_ref = refs
        res_ref = None
    cin = x_ref.shape[-1]
    tn = w_ref.shape[-1]
    M = N * th * Wo
    r0 = pl.multiple_of(pl.program_id(1) * th, th)
    acc = jnp.zeros((M, tn), jnp.float32)
    for t, (kh, kw) in enumerate(kh_kw):
        xs = x_ref[:, pl.ds(r0 + kh * dil, th), pl.ds(kw * dil, Wo), :]
        acc = acc + jnp.dot(xs.reshape(M, cin), w_ref[t],
                            preferred_element_type=jnp.float32)
    y = acc * sc_ref[...] + sh_ref[...]
    if has_res:
        y = y + res_ref[...].reshape(M, tn).astype(jnp.float32)
    if act == "relu":
        y = jnp.maximum(y, 0.0)
    elif act == "prelu":
        y = jnp.where(y >= 0.0, y, y * al_ref[...])
    o_ref[...] = y.astype(o_ref.dtype).reshape(o_ref.shape)


def conv2d_fused(x, w, scale, shift, *, alpha=None, act="none", residual=None,
                 padding=0, dilation=1, out_dtype=jnp.bfloat16, acc_budget=65536):
    """NHWC stride-1 conv with fused BN/bias + residual + activation epilogue."""
    N, H, W, Cin = x.shape
    KH, KW, _, Cout = w.shape
    Hp, Wp = H + 2 * padding, W + 2 * padding
    Ho = Hp - dilation * (KH - 1)
    Wo = Wp - dilation * (KW - 1)
    T = KH * KW

    xp = x.astype(jnp.bfloat16)
    if padding:
        xp = jnp.pad(xp, ((0, 0), (padding, padding), (padding, padding), (0, 0)))
    wr = jnp.asarray(w, jnp.bfloat16).reshape(T, Cin, Cout)
    sc = jnp.asarray(scale, jnp.float32).reshape(1, Cout)
    sh = jnp.asarray(shift, jnp.float32).reshape(1, Cout)
    al = (jnp.zeros((1, Cout), jnp.float32) if alpha is None
          else jnp.asarray(alpha, jnp.float32).reshape(1, Cout))

    # Cout tile: 256 fills the 256-wide MXU on v6e/v7x (and halves grid/DMA count
    # everywhere); fall back to 128 / full Cout.
    if Cout % 256 == 0:
        tn = 256
    elif Cout % 128 == 0:
        tn = 128
    else:
        tn = Cout

    # Output-row tile: bound the (N*th*Wo, tn) f32 accumulator to <= ~256-512 KiB so the
    # tap accumulation stays mostly in vregs instead of a VMEM read-modify-write.
    th = Ho
    while N * th * Wo * tn > acc_budget and th % 2 == 0 and th // 2 >= 8:
        th //= 2
    if Ho % th:
        th = Ho

    kh_kw = tuple((kh, kw) for kh in range(KH) for kw in range(KW))
    has_res = residual is not None

    in_specs = [
        pl.BlockSpec((N, Hp, Wp, Cin), lambda j, i: (0, 0, 0, 0)),   # whole batch resident
        pl.BlockSpec((T, Cin, tn), lambda j, i: (0, 0, j)),           # resident across rows
        pl.BlockSpec((1, tn), lambda j, i: (0, j)),
        pl.BlockSpec((1, tn), lambda j, i: (0, j)),
        pl.BlockSpec((1, tn), lambda j, i: (0, j)),
    ]
    operands = [xp, wr, sc, sh, al]
    if has_res:
        in_specs.append(pl.BlockSpec((N, th, Wo, tn), lambda j, i: (0, i, 0, j)))
        operands.append(residual.astype(jnp.bfloat16))

    return pl.pallas_call(
        functools.partial(_conv_kernel, kh_kw=kh_kw, dil=dilation,
                          N=N, th=th, Wo=Wo, act=act, has_res=has_res),
        out_shape=jax.ShapeDtypeStruct((N, Ho, Wo, Cout), out_dtype),
        grid=(Cout // tn, Ho // th),
        in_specs=in_specs,
        out_specs=pl.BlockSpec((N, th, Wo, tn), lambda j, i: (0, i, 0, j)),
        compiler_params=pltpu.CompilerParams(
            dimension_semantics=("parallel", "parallel"),
            vmem_limit_bytes=32 * 1024 * 1024),
    )(*operands)


def _mm_kernel(a_ref, b_ref, sc_ref, sh_ref, al_ref, o_ref, *, act):
    y = jnp.dot(a_ref[...], b_ref[...], preferred_element_type=jnp.float32)
    y = y * sc_ref[...] + sh_ref[...]
    if act == "relu":
        y = jnp.maximum(y, 0.0)
    elif act == "prelu":
        y = jnp.where(y >= 0.0, y, y * al_ref[...])
    o_ref[...] = y.astype(o_ref.dtype)


def matmul_fused(a, b, scale, shift, *, alpha=None, act="none", out_dtype=jnp.bfloat16):
    """(M,K)@(K,N) bf16 MXU matmul with fused affine + activation (stride-2 convs via im2col)."""
    M, K = a.shape
    _, Nc = b.shape
    a = a.astype(jnp.bfloat16)
    b = jnp.asarray(b, jnp.bfloat16)
    sc = jnp.asarray(scale, jnp.float32).reshape(1, Nc)
    sh = jnp.asarray(shift, jnp.float32).reshape(1, Nc)
    al = (jnp.zeros((1, Nc), jnp.float32) if alpha is None
          else jnp.asarray(alpha, jnp.float32).reshape(1, Nc))
    tm = 256 if M % 256 == 0 else M
    assert M % tm == 0 and tm % 8 == 0
    return pl.pallas_call(
        functools.partial(_mm_kernel, act=act),
        out_shape=jax.ShapeDtypeStruct((M, Nc), out_dtype),
        grid=(M // tm,),
        in_specs=[pl.BlockSpec((tm, K), lambda i: (i, 0)),
                  pl.BlockSpec((K, Nc), lambda i: (0, 0)),
                  pl.BlockSpec((1, Nc), lambda i: (0, 0)),
                  pl.BlockSpec((1, Nc), lambda i: (0, 0)),
                  pl.BlockSpec((1, Nc), lambda i: (0, 0))],
        out_specs=pl.BlockSpec((tm, Nc), lambda i: (i, 0)),
        compiler_params=pltpu.CompilerParams(dimension_semantics=("parallel",)),
    )(a, b, sc, sh, al)


def _maxpool_kernel(p00_ref, p01_ref, p10_ref, p11_ref, o_ref):
    """3x3 stride-2 maxpool from the 4 stride-2 phase images (all taps unstrided)."""
    Ho, Wo = o_ref.shape[1], o_ref.shape[2]

    def tap(ref, di, dj):
        return ref[0, di:di + Ho, dj:dj + Wo, :]

    m = tap(p00_ref, 0, 0)
    for ref, di, dj in ((p01_ref, 0, 0), (p00_ref, 0, 1),
                        (p10_ref, 0, 0), (p11_ref, 0, 0), (p10_ref, 0, 1),
                        (p00_ref, 1, 0), (p01_ref, 1, 0), (p00_ref, 1, 1)):
        m = jnp.maximum(m, tap(ref, di, dj))
    o_ref[...] = m.reshape(o_ref.shape)


def _left_apply_kernel(b_ref, x_ref, o_ref):
    y = jnp.dot(b_ref[...], x_ref[0], preferred_element_type=jnp.float32)
    o_ref[...] = y.reshape(o_ref.shape).astype(o_ref.dtype)


def _psp_mix_kernel(s_ref, g_ref, o_ref, *, n_scales, cper):
    outs = []
    for s in range(n_scales):
        gs = g_ref[0, :, s * cper:(s + 1) * cper]
        outs.append(jnp.dot(s_ref[s], gs, preferred_element_type=jnp.float32))
    o_ref[0] = jnp.concatenate(outs, axis=-1).astype(o_ref.dtype)


# --------------------------------------------------------------------------- glue / helpers

def bn_scale_shift(bn, bias=None):
    scale = bn["gamma"] / jnp.sqrt(bn["var"] + _EPS)
    base = (bias - bn["mean"]) if bias is not None else (-bn["mean"])
    shift = bn["beta"] + scale * base
    return scale, shift


def _im2col(x, ksize, stride, padding):
    """Only used for the two tiny stride-2 convs (stem, layer2 conv1)."""
    N, H, W, Cin = x.shape
    xp = jnp.pad(x, ((0, 0), (padding, padding), (padding, padding), (0, 0)))
    Ho = (H + 2 * padding - ksize) // stride + 1
    Wo = (W + 2 * padding - ksize) // stride + 1
    cols = []
    for kh in range(ksize):
        for kw in range(ksize):
            cols.append(xp[:, kh:kh + (Ho - 1) * stride + 1:stride,
                           kw:kw + (Wo - 1) * stride + 1:stride, :])
    pat = jnp.concatenate(cols, axis=-1)
    return pat.reshape(N * Ho * Wo, ksize * ksize * Cin), (Ho, Wo)


def max_pool_3x3_s2_p1(x):
    N, H, W, C = x.shape
    # input is post-ReLU (>= 0), so zero padding preserves max semantics
    xp = jnp.pad(x, ((0, 0), (1, 1), (1, 1), (0, 0)))
    Ho = (H + 2 - 3) // 2 + 1
    Wo = (W + 2 - 3) // 2 + 1
    p00 = xp[:, 0::2, 0::2, :]
    p01 = xp[:, 0::2, 1::2, :]
    p10 = xp[:, 1::2, 0::2, :]
    p11 = xp[:, 1::2, 1::2, :]
    hp, wp = p00.shape[1], p00.shape[2]
    spec = pl.BlockSpec((1, hp, wp, C), lambda n: (n, 0, 0, 0))
    return pl.pallas_call(
        _maxpool_kernel,
        out_shape=jax.ShapeDtypeStruct((N, Ho, Wo, C), x.dtype),
        grid=(N,),
        in_specs=[spec, spec, spec, spec],
        out_specs=pl.BlockSpec((1, Ho, Wo, C), lambda n: (n, 0, 0, 0)),
        compiler_params=pltpu.CompilerParams(dimension_semantics=("parallel",)),
    )(p00, p01, p10, p11)


def _bilinear_matrix_np(out_size, in_size, align_corners):
    M = np.zeros((out_size, in_size), np.float32)
    for o in range(out_size):
        if align_corners:
            src = o * (in_size - 1) / (out_size - 1) if out_size > 1 else 0.0
        else:
            src = (o + 0.5) * in_size / out_size - 0.5
            src = max(src, 0.0)
        i0 = min(int(np.floor(src)), in_size - 1)
        i1 = min(i0 + 1, in_size - 1)
        frac = src - i0
        M[o, i0] += 1.0 - frac
        M[o, i1] += frac
    return M


def _adaptive_pool_matrix_np(out_size, in_size):
    M = np.zeros((out_size, in_size), np.float32)
    for o in range(out_size):
        s = (o * in_size) // out_size
        e = -((-(o + 1) * in_size) // out_size)          # ceil((o+1)*in/out)
        M[o, s:e] = 1.0 / (e - s)
    return M


@functools.lru_cache(maxsize=None)
def _up2x_kron(h, w):
    # nn.Upsample(scale_factor=2, mode='bilinear', align_corners=True) as one matrix
    return jnp.asarray(np.kron(_bilinear_matrix_np(2 * h, h, True),
                               _bilinear_matrix_np(2 * w, w, True)), jnp.bfloat16)


@functools.lru_cache(maxsize=None)
def _psp_spatial_stack(h, w, sizes):
    # combined (upsample-to-(h,w) @ adaptive-pool-to-(s,s)) spatial operator per scale;
    # DenseFusion-era F.upsample(mode='bilinear') => align_corners=True (review note).
    mats = []
    for s in sizes:
        ph = _bilinear_matrix_np(h, s, True) @ _adaptive_pool_matrix_np(s, h)
        pw = _bilinear_matrix_np(w, s, True) @ _adaptive_pool_matrix_np(s, w)
        mats.append(np.kron(ph, pw))
    return jnp.asarray(np.stack(mats), jnp.bfloat16)


def bilinear_up2x(x):
    """x: (N,H,W,C) -> (N,2H,2W,C), align_corners=True, per-image lane-dense matmul.

    Grid is (Q tiles, C tiles, N) so the interpolation-matrix tile stays resident across
    batch/channel tiles (fetched once per Q tile).
    """
    N, H, W, C = x.shape
    B = _up2x_kron(H, W)                    # (4HW, HW)
    Q, R = B.shape
    xf = x.astype(jnp.bfloat16).reshape(N, R, C)
    tc = min(128, C)
    tq = min(512, Q)
    assert Q % tq == 0 and C % tc == 0
    out = pl.pallas_call(
        _left_apply_kernel,
        out_shape=jax.ShapeDtypeStruct((N, Q, C), jnp.bfloat16),
        grid=(Q // tq, C // tc, N),
        in_specs=[pl.BlockSpec((tq, R), lambda i, j, n: (i, 0)),
                  pl.BlockSpec((1, R, tc), lambda i, j, n: (n, 0, j))],
        out_specs=pl.BlockSpec((1, tq, tc), lambda i, j, n: (n, i, j)),
        compiler_params=pltpu.CompilerParams(
            dimension_semantics=("parallel", "arbitrary", "arbitrary")),
    )(B, xf)
    return out.reshape(N, 2 * H, 2 * W, C)


def psp_spatial_mix(S_stack, G):
    """G: (N, HW, 4*C); per scale s: out[:, :, sC:(s+1)C] = S_s @ G[:, :, sC:(s+1)C].

    One grid step per image with an in-kernel loop over the 4 scales (G block resident).
    """
    N, HW, C4 = G.shape
    ns = S_stack.shape[0]
    cper = C4 // ns
    return pl.pallas_call(
        functools.partial(_psp_mix_kernel, n_scales=ns, cper=cper),
        out_shape=jax.ShapeDtypeStruct((N, HW, C4), jnp.bfloat16),
        grid=(N,),
        in_specs=[pl.BlockSpec((ns, HW, HW), lambda n: (0, 0, 0)),
                  pl.BlockSpec((1, HW, C4), lambda n: (n, 0, 0))],
        out_specs=pl.BlockSpec((1, HW, C4), lambda n: (n, 0, 0)),
        compiler_params=pltpu.CompilerParams(dimension_semantics=("parallel",)),
    )(S_stack, G)


# --------------------------------------------------------------------------- parameters

class KeyGen:
    def __init__(self, seed):
        self._key = jax.random.PRNGKey(seed)

    def __call__(self):
        self._key, sub = jax.random.split(self._key)
        return sub


def make_params(seed=0):
    kg = KeyGen(seed)

    def conv_w(cin, cout, k):
        fan = float(k * k * cin)
        return jax.random.normal(kg(), (k, k, cin, cout), jnp.float32) / np.sqrt(fan)

    def bias(c):
        return 0.1 * jax.random.normal(kg(), (c,), jnp.float32)

    def bn(c):
        return dict(gamma=1.0 + 0.1 * jax.random.normal(kg(), (c,), jnp.float32),
                    beta=0.1 * jax.random.normal(kg(), (c,), jnp.float32),
                    mean=0.1 * jax.random.normal(kg(), (c,), jnp.float32),
                    var=1.0 + 0.1 * jax.random.uniform(kg(), (c,), jnp.float32))

    # ----- dilated ResNet-18 backbone (DenseFusion-style feature extractor) -----
    backbone = dict(conv1=conv_w(3, 64, 3), bn1=bn(64), layers=[])
    inplanes = 64
    for planes, blocks, stride, dilation in [(64, 2, 1, 1), (128, 2, 2, 1),
                                             (256, 2, 1, 2), (512, 2, 1, 4)]:
        layer = []
        for bi in range(blocks):
            cin = inplanes
            if bi == 0:
                bstride, bdil = stride, 1
                need_ds = (stride != 1) or (inplanes != planes)
            else:
                bstride, bdil = 1, dilation
                need_ds = False
            blk = dict(stride=bstride, dil=bdil,
                       w1=conv_w(cin, planes, 3), bn1=bn(planes),
                       w2=conv_w(planes, planes, 3), bn2=bn(planes))
            if need_ds:
                blk["dw"] = conv_w(cin, planes, 1)
                blk["dbn"] = bn(planes)
            layer.append(blk)
            inplanes = planes
        backbone["layers"].append(layer)

    # ----- PSPModule(512, 1024, sizes=(1,2,3,6)) -----
    stage_ws = [conv_w(512, 512, 1) for _ in (1, 2, 3, 6)]       # 1x1, bias=False
    psp = dict(stage_w_cat=jnp.concatenate(stage_ws, axis=-1),   # (1,1,512,2048)
               bottleneck_w=conv_w(512 * 5, 1024, 1),            # kernel_size=1 per spec
               bottleneck_b=bias(1024))

    def psp_up(cin, cout):
        # nn.PReLU() default is a single shared alpha=0.25; broadcasting it per-channel
        # is numerically identical at init.
        return dict(w=conv_w(cin, cout, 3), b=bias(cout), bn=bn(cout),
                    alpha=jnp.full((cout,), 0.25, jnp.float32))

    final = dict(w=conv_w(64, 128, 1), b=bias(128), bn=bn(128),
                 alpha=jnp.full((128,), 0.25, jnp.float32))

    return dict(backbone=backbone, psp=psp,
                up1=psp_up(1024, 256), up2=psp_up(256, 64), up3=psp_up(64, 64),
                final=final)


# --------------------------------------------------------------------------- forward pass

def basic_block(x, blk):
    s1, t1 = bn_scale_shift(blk["bn1"])
    if blk["stride"] == 1:
        out = conv2d_fused(x, blk["w1"], s1, t1, act="relu",
                           padding=blk["dil"], dilation=blk["dil"])
    else:                                           # only layer2 block0 (tiny): im2col path
        N = x.shape[0]
        cout = blk["w1"].shape[-1]
        a, (Ho, Wo) = _im2col(x.astype(jnp.bfloat16), 3, blk["stride"], 1)
        out = matmul_fused(a, blk["w1"].reshape(-1, cout), s1, t1,
                           act="relu").reshape(N, Ho, Wo, cout)

    if "dw" in blk:
        xs = x[:, ::blk["stride"], ::blk["stride"], :] if blk["stride"] > 1 else x
        sd, td = bn_scale_shift(blk["dbn"])
        res = conv2d_fused(xs, blk["dw"], sd, td, act="none")
    else:
        res = x

    s2, t2 = bn_scale_shift(blk["bn2"])
    # conv2 + BN + residual add + ReLU fused into one kernel
    return conv2d_fused(out, blk["w2"], s2, t2, act="relu", residual=res,
                        padding=blk["dil"], dilation=blk["dil"])


def backbone_forward(x, bb):
    N = x.shape[0]
    s, t = bn_scale_shift(bb["bn1"])
    a, (Ho, Wo) = _im2col(x.astype(jnp.bfloat16), 3, 2, 1)       # stem: 3x3 stride 2
    y = matmul_fused(a, bb["conv1"].reshape(-1, 64), s, t, act="relu")
    y = y.reshape(N, Ho, Wo, 64)
    y = max_pool_3x3_s2_p1(y)
    for layer in bb["layers"]:
        for blk in layer:
            y = basic_block(y, blk)
    return y                                                     # layer4 output (class_f unused)


def psp_forward(f, psp):
    N, H, W, C = f.shape
    HW = H * W
    # pool -> 1x1 conv -> upsample is linear; by associativity it equals
    # (upsample @ pool) applied after the channel mix.  One fused 1x1 conv does all
    # four stage channel mixes at once (weights concatenated along Cout).
    g = conv2d_fused(f, psp["stage_w_cat"],
                     jnp.ones((4 * C,), jnp.float32), jnp.zeros((4 * C,), jnp.float32),
                     act="none")                                  # (N,H,W,4C)
    g = g.reshape(N, HW, 4 * C)
    priors = psp_spatial_mix(_psp_spatial_stack(H, W, (1, 2, 3, 6)), g)   # (N,HW,4C)
    cat = jnp.concatenate([priors, f.astype(jnp.bfloat16).reshape(N, HW, C)], axis=-1)
    cat = cat.reshape(N, H, W, 5 * C)
    return conv2d_fused(cat, psp["bottleneck_w"],
                        jnp.ones((1024,), jnp.float32), psp["bottleneck_b"], act="relu")


def psp_upsample(x, p):
    y = bilinear_up2x(x)
    s, t = bn_scale_shift(p["bn"], bias=p["b"])      # fold conv bias into BN shift
    return conv2d_fused(y, p["w"], s, t, act="prelu", alpha=p["alpha"], padding=1)


def model_forward(x_nchw, params):
    """ModifiedResnet forward. Input/output are NCHW to match PyTorch."""
    x = jnp.transpose(x_nchw, (0, 2, 3, 1)).astype(jnp.float32)   # NCHW -> NHWC
    f = backbone_forward(x, params["backbone"])
    p = psp_forward(f, params["psp"])
    # drop_1 / drop_2: Dropout2d -> eval-mode identity
    p = psp_upsample(p, params["up1"])
    p = psp_upsample(p, params["up2"])
    p = psp_upsample(p, params["up3"])
    s, t = bn_scale_shift(params["final"]["bn"], bias=params["final"]["b"])
    y = conv2d_fused(p, params["final"]["w"], s, t, act="prelu",
                     alpha=params["final"]["alpha"], out_dtype=jnp.float32)
    return jnp.transpose(y, (0, 3, 1, 2))                          # NHWC -> NCHW


# --------------------------------------------------------------------------- main

if __name__ == "__main__":
    params = make_params(seed=0)
    x = jax.random.normal(jax.random.PRNGKey(0), (2, 3, 64, 64), jnp.float32)
    y = model_forward(x, params)
    y = jax.block_until_ready(y)
    assert y.shape == (2, 128, 64, 64), y.shape
    assert bool(jnp.all(jnp.isfinite(y)))
    print("KERNEL_OK")
</pallas_src>

<mosaic_0001>
module attributes {stable_mosaic.version = 11 : i64} {
  func.func @_mm_kernel(%arg0: i32, %arg1: memref<256x27xbf16, #tpu.memory_space<vmem>>, %arg2: memref<27x64xbf16, #tpu.memory_space<vmem>>, %arg3: memref<1x64xf32, #tpu.memory_space<vmem>>, %arg4: memref<1x64xf32, #tpu.memory_space<vmem>>, %arg5: memref<1x64xf32, #tpu.memory_space<vmem>>, %arg6: memref<256x64xbf16, #tpu.memory_space<vmem>>) attributes {dimension_semantics = [#tpu.dimension_semantics<parallel>], iteration_bounds = array<i64: 8>, scalar_prefetch = 0 : i64, scratch_operands = 0 : i64, tpu.core_type = #tpu.core_type<tc>, window_params = [{transform_indices = @transform_0, window_bounds = array<i64: 256, 27>}, {pipeline_mode = #tpu.pipeline_mode<synchronous>, transform_indices = @transform_1, window_bounds = array<i64: 27, 64>}, {pipeline_mode = #tpu.pipeline_mode<synchronous>, transform_indices = @transform_2, window_bounds = array<i64: 1, 64>}, {pipeline_mode = #tpu.pipeline_mode<synchronous>, transform_indices = @transform_3, window_bounds = array<i64: 1, 64>}, {pipeline_mode = #tpu.pipeline_mode<synchronous>, transform_indices = @transform_4, window_bounds = array<i64: 1, 64>}, {transform_indices = @transform_5, window_bounds = array<i64: 256, 64>}]} {
    %c0 = arith.constant 0 : index
    %c0_0 = arith.constant 0 : index
    %0 = vector.load %arg1[%c0, %c0_0] : memref<256x27xbf16, #tpu.memory_space<vmem>>, vector<256x27xbf16>
    %c0_1 = arith.constant 0 : index
    %c0_2 = arith.constant 0 : index
    %1 = vector.load %arg2[%c0_1, %c0_2] : memref<27x64xbf16, #tpu.memory_space<vmem>>, vector<27x64xbf16>
    %cst = arith.constant dense<0.000000e+00> : vector<256x64xf32>
    %2 = tpu.matmul %0, %1, %cst {dimension_numbers = #tpu.dot_dimension_numbers<[1], [0], [0], [1], [0, 0, 1, 1], [], []>} : vector<256x27xbf16>, vector<27x64xbf16>, vector<256x64xf32> -> vector<256x64xf32>
    %c0_3 = arith.constant 0 : index
    %c0_4 = arith.constant 0 : index
    %3 = vector.load %arg3[%c0_3, %c0_4] : memref<1x64xf32, #tpu.memory_space<vmem>>, vector<1x64xf32>
    %4 = vector.broadcast %3 : vector<1x64xf32> to vector<256x64xf32>
    %5 = arith.mulf %2, %4 : vector<256x64xf32>
    %c0_5 = arith.constant 0 : index
    %c0_6 = arith.constant 0 : index
    %6 = vector.load %arg4[%c0_5, %c0_6] : memref<1x64xf32, #tpu.memory_space<vmem>>, vector<1x64xf32>
    %7 = vector.broadcast %6 : vector<1x64xf32> to vector<256x64xf32>
    %8 = arith.addf %5, %7 : vector<256x64xf32>
    %cst_7 = arith.constant 0.000000e+00 : f32
    %9 = vector.broadcast %cst_7 : f32 to vector<256x64xf32>
    %10 = arith.maximumf %8, %9 : vector<256x64xf32>
    %11 = arith.truncf %10 : vector<256x64xf32> to vector<256x64xbf16>
    %c0_8 = arith.constant 0 : index
    %c0_9 = arith.constant 0 : index
    %12 = vector.load %arg6[%c0_8, %c0_9] : memref<256x64xbf16, #tpu.memory_space<vmem>>, vector<256x64xbf16>
    tpu.vector_store %arg6[%c0_8, %c0_9], %11 {strides = array<i32>} : memref<256x64xbf16, #tpu.memory_space<vmem>>, vector<256x64xbf16>,
    return
  }
  func.func @transform_0(%arg0: i32) -> (i32, i32) {
    %c0_i32 = arith.constant 0 : i32
    %c0_i32_0 = arith.constant 0 : i32
    return %arg0, %c0_i32 : i32, i32
  }
  func.func @transform_1(%arg0: i32) -> (i32, i32) {
    %c0_i32 = arith.constant 0 : i32
    %c0_i32_0 = arith.constant 0 : i32
    %c0_i32_1 = arith.constant 0 : i32
    return %c0_i32, %c0_i32_0 : i32, i32
  }
  func.func @transform_2(%arg0: i32) -> (i32, i32) {
    %c0_i32 = arith.constant 0 : i32
    %c0_i32_0 = arith.constant 0 : i32
    %c0_i32_1 = arith.constant 0 : i32
    return %c0_i32, %c0_i32_0 : i32, i32
  }
  func.func @transform_3(%arg0: i32) -> (i32, i32) {
    %c0_i32 = arith.constant 0 : i32
    %c0_i32_0 = arith.constant 0 : i32
    %c0_i32_1 = arith.constant 0 : i32
    return %c0_i32, %c0_i32_0 : i32, i32
  }
  func.func @transform_4(%arg0: i32) -> (i32, i32) {
    %c0_i32 = arith.constant 0 : i32
    %c0_i32_0 = arith.constant 0 : i32
    %c0_i32_1 = arith.constant 0 : i32
    return %c0_i32, %c0_i32_0 : i32, i32
  }
  func.func @transform_5(%arg0: i32) -> (i32, i32) {
    %c0_i32 = arith.constant 0 : i32
    %c0_i32_0 = arith.constant 0 : i32
    return %arg0, %c0_i32 : i32, i32
  }
}

</mosaic_0001>

<llo_original>
// kernel: tpu_custom_call.1
$region0: #{tpu_custom_call.1}
  #allocation0 [shape = 'u32[]', space=smem, size = 0x4, offset = 0x4, fixed_abs, tag = 'smem constant byte address 0x4 - core index']
  #allocation1 [shape = 'u32[72,128]{1,0:T(1,128)}', space=vmem, size = 0x9000, scoped, tag = 'internal scratch']
  %s0 = inlined_call_operand.vmem [shape: bf16[2048,27], index: 0, kind: input, shape index: {}]
  %s1 = inlined_call_operand.vmem [shape: bf16[27,64], index: 1, kind: input, shape index: {}]
  %s2 = inlined_call_operand.vmem [shape: f32[1,64], index: 2, kind: input, shape index: {}]
  %s3 = inlined_call_operand.vmem [shape: f32[1,64], index: 3, kind: input, shape index: {}]
  %s4 = inlined_call_operand.vmem [shape: f32[1,64], index: 4, kind: input, shape index: {}]
  %s5 = inlined_call_operand.vmem [shape: bf16[2048,64], index: 5, kind: output, shape index: {}]
  %s6 = sld [smem:[#allocation0]]
  $region53: #{tpu_custom_call.1} parent=0
    _
  %s8 = ssub.s32 1, %s6
  %s9 = scalar_select 0, %s8, %s6
  loop: start=0, step=1, limit=10
  $region2: #{tpu_custom_call.1} parent=0 // loop_pre_header
    _
  $region3: #{tpu_custom_call.1} parent=0 // loop_header
    %s11 = sphi 0, %s15
    %p12 = scmp.ge.s32.totalorder %s11, 10
    %s21 = sphi 0, %s23
    %s24 = sphi 0, %s21
    %s25 = sphi 0, %s24
    %s41 = sphi 0, %s25
    %s45 = sphi 0, %s45
    %s47 = sphi 0, %s45
    %s48 = sphi 0, %s47
    %s62 = sphi 0, %s48
    %s66 = sphi 0, %s66
    %s68 = sphi 0, %s66
    %s69 = sphi 0, %s68
    %s83 = sphi 0, %s69
    %s87 = sphi 0, %s87
    %s89 = sphi 0, %s87
    %s90 = sphi 0, %s89
    %s104 = sphi 0, %s90
    %s108 = sphi 0, %s108
    %s110 = sphi 0, %s108
    %s111 = sphi 0, %s110
    %s125 = sphi 0, %s111
    %s131 = sphi 0, %s133
    %s134 = sphi 0, %s131
    %s135 = sphi 0, %s134
    %s151 = sphi 0, %s135
  $region4: #{tpu_custom_call.1} parent=0 // loop_header_branch
    %14 = sbr.rel (%p12) target = $region8
  $region5: #{tpu_custom_call.1} parent=0 // loop_body
    %s16 = ssub.s32 %s11, 1
    %s17 = ssub.s32 %s11, 2
    %s18 = sadd.s32 %s11, 1
    %s19 = ssub.s32 %s11, %s18
    %p20 = scmp.eq.s32.totalorder %s19, 0
    %s22 = sadd.s32 %s21, 1
    %s23 = scalar_select %p20, %s21, %s22
    %p26 = pneg %p20
    %p27 = scmp.eq.s32.totalorder %s11, 7
    %p28 = por %p26, %p27
    %p29 = scmp.ne.s32.totalorder %s21, %s24
    %p30 = scmp.eq.s32.totalorder %s11, 0
    %p31 = por %p29, %p30
    %p32 = scmp.ne.s32.totalorder %s21, %s24
    %p33 = scmp.eq.s32.totalorder %s16, 7
    %p34 = por %p32, %p33
    %p35 = scmp.ne.s32.totalorder %s24, %s25
    %p36 = scmp.eq.s32.totalorder %s16, 0
    %p37 = por %p35, %p36
    %p38 = scmp.ne.s32.totalorder %s24, %s25
    %p39 = scmp.eq.s32.totalorder %s17, 7
    %p40 = por %p38, %p39
    %p42 = scmp.ne.s32.totalorder %s25, %s41
    %p43 = scmp.eq.s32.totalorder %s17, 0
    %p44 = por %p42, %p43
    %s46 = sadd.s32 %s45, 1
    %p49 = scmp.eq.s32.totalorder %s11, 7
    %p50 = scmp.ne.s32.totalorder %s45, %s47
    %p51 = scmp.eq.s32.totalorder %s11, 0
    %p52 = por %p50, %p51
    %p53 = scmp.ne.s32.totalorder %s45, %s47
    %p54 = scmp.eq.s32.totalorder %s16, 7
    %p55 = por %p53, %p54
    %p56 = scmp.ne.s32.totalorder %s47, %s48
    %p57 = scmp.eq.s32.totalorder %s16, 0
    %p58 = por %p56, %p57
    %p59 = scmp.ne.s32.totalorder %s47, %s48
    %p60 = scmp.eq.s32.totalorder %s17, 7
    %p61 = por %p59, %p60
    %p63 = scmp.ne.s32.totalorder %s48, %s62
    %p64 = scmp.eq.s32.totalorder %s17, 0
    %p65 = por %p63, %p64
    %s67 = sadd.s32 %s66, 1
    %p70 = scmp.eq.s32.totalorder %s11, 7
    %p71 = scmp.ne.s32.totalorder %s66, %s68
    %p72 = scmp.eq.s32.totalorder %s11, 0
    %p73 = por %p71, %p72
    %p74 = scmp.ne.s32.totalorder %s66, %s68
    %p75 = scmp.eq.s32.totalorder %s16, 7
    %p76 = por %p74, %p75
    %p77 = scmp.ne.s32.totalorder %s68, %s69
    %p78 = scmp.eq.s32.totalorder %s16, 0
    %p79 = por %p77, %p78
    %p80 = scmp.ne.s32.totalorder %s68, %s69
    %p81 = scmp.eq.s32.totalorder %s17, 7
    %p82 = por %p80, %p81
    %p84 = scmp.ne.s32.totalorder %s69, %s83
    %p85 = scmp.eq.s32.totalorder %s17, 0
    %p86 = por %p84, %p85
    %s88 = sadd.s32 %s87, 1
    %p91 = scmp.eq.s32.totalorder %s11, 7
    %p92 = scmp.ne.s32.totalorder %s87, %s89
    %p93 = scmp.eq.s32.totalorder %s11, 0
    %p94 = por %p92, %p93
    %p95 = scmp.ne.s32.totalorder %s87, %s89
    %p96 = scmp.eq.s32.totalorder %s16, 7
    %p97 = por %p95, %p96
    %p98 = scmp.ne.s32.totalorder %s89, %s90
    %p99 = scmp.eq.s32.totalorder %s16, 0
    %p100 = por %p98, %p99
    %p101 = scmp.ne.s32.totalorder %s89, %s90
    %p102 = scmp.eq.s32.totalorder %s17, 7
    %p103 = por %p101, %p102
    %p105 = scmp.ne.s32.totalorder %s90, %s104
    %p106 = scmp.eq.s32.totalorder %s17, 0
    %p107 = por %p105, %p106
    %s109 = sadd.s32 %s108, 1
    %p112 = scmp.eq.s32.totalorder %s11, 7
    %p113 = scmp.ne.s32.totalorder %s108, %s110
    %p114 = scmp.eq.s32.totalorder %s11, 0
    %p115 = por %p113, %p114
    %p116 = scmp.ne.s32.totalorder %s108, %s110
    %p117 = scmp.eq.s32.totalorder %s16, 7
    %p118 = por %p116, %p117
    %p119 = scmp.ne.s32.totalorder %s110, %s111
    %p120 = scmp.eq.s32.totalorder %s16, 0
    %p121 = por %p119, %p120
    %p122 = scmp.ne.s32.totalorder %s110, %s111
    %p123 = scmp.eq.s32.totalorder %s17, 7
    %p124 = por %p122, %p123
    %p126 = scmp.ne.s32.totalorder %s111, %s125
    %p127 = scmp.eq.s32.totalorder %s17, 0
    %p128 = por %p126, %p127
    %s129 = ssub.s32 %s11, %s18
    %p130 = scmp.eq.s32.totalorder %s129, 0
    %s132 = sadd.s32 %s131, 1
    %s133 = scalar_select %p130, %s131, %s132
    %p136 = pneg %p130
    %p137 = scmp.eq.s32.totalorder %s11, 7
    %p138 = por %p136, %p137
    %p139 = scmp.ne.s32.totalorder %s131, %s134
    %p140 = scmp.eq.s32.totalorder %s11, 0
    %p141 = por %p139, %p140
    %p142 = scmp.ne.s32.totalorder %s131, %s134
    %p143 = scmp.eq.s32.totalorder %s16, 7
    %p144 = por %p142, %p143
    %p145 = scmp.ne.s32.totalorder %s134, %s135
    %p146 = scmp.eq.s32.totalorder %s16, 0
    %p147 = por %p145, %p146
    %p148 = scmp.ne.s32.totalorder %s134, %s135
    %p149 = scmp.eq.s32.totalorder %s17, 7
    %p150 = por %p148, %p149
    %p152 = scmp.ne.s32.totalorder %s135, %s151
    %p153 = scmp.eq.s32.totalorder %s17, 0
    %p154 = por %p152, %p153
    %p155 = scmp.le.s32.totalorder 1, %s11
    %p156 = scmp.lt.s32.totalorder %s11, 9
    %p157 = pnand %p155, %p156
    %p158 = pneg %p157
    // Predicated region
    $region9: #{tpu_custom_call.1} parent=5 // pred_check
      _
    $region10: #{tpu_custom_call.1} parent=5 // pred_check_branch
      %160 = sbr.rel (%p157) target = $region12
    $region11: #{tpu_custom_call.1} parent=5 // pred_region
      %s161 = ssub.s32 %s11, 1
      // Predicated region
      $region13: #{tpu_custom_call.1} parent=11 // pred_check
        %p162 = pneg %p58
      $region14: #{tpu_custom_call.1} parent=11 // pred_check_branch
        %164 = sbr.rel (%p162) target = $region16
      $region15: #{tpu_custom_call.1} parent=11 // pred_region
        _
      $region16: #{tpu_custom_call.1} parent=11 // pred_fallthru
        _
      // Predicated region
      $region17: #{tpu_custom_call.1} parent=11 // pred_check
        %p165 = pneg %p79
      $region18: #{tpu_custom_call.1} parent=11 // pred_check_branch
        %167 = sbr.rel (%p165) target = $region20
      $region19: #{tpu_custom_call.1} parent=11 // pred_region
        _
      $region20: #{tpu_custom_call.1} parent=11 // pred_fallthru
        _
      // Predicated region
      $region21: #{tpu_custom_call.1} parent=11 // pred_check
        %p168 = pneg %p100
      $region22: #{tpu_custom_call.1} parent=11 // pred_check_branch
        %170 = sbr.rel (%p168) target = $region24
      $region23: #{tpu_custom_call.1} parent=11 // pred_region
        _
      $region24: #{tpu_custom_call.1} parent=11 // pred_fallthru
        _
      // Predicated region
      $region25: #{tpu_custom_call.1} parent=11 // pred_check
        %p171 = pneg %p121
      $region26: #{tpu_custom_call.1} parent=11 // pred_check_branch
        %173 = sbr.rel (%p171) target = $region28
      $region27: #{tpu_custom_call.1} parent=11 // pred_region
        _
      $region28: #{tpu_custom_call.1} parent=11 // pred_fallthru
        _
    $region12: #{tpu_custom_call.1} parent=5 // pred_fallthru
      _
    %p174 = scmp.lt.s32.totalorder %s11, 8
    // Predicated region
    $region29: #{tpu_custom_call.1} parent=5 // pred_check
      %p175 = pneg %p174
    $region30: #{tpu_custom_call.1} parent=5 // pred_check_branch
      %177 = sbr.rel (%p175) target = $region32
    $region31: #{tpu_custom_call.1} parent=5 // pred_region
      // Predicated region
      $region33: #{tpu_custom_call.1} parent=31 // pred_check
        %p178 = pneg %p31
      $region34: #{tpu_custom_call.1} parent=31 // pred_check_branch
        %180 = sbr.rel (%p178) target = $region36
      $region35: #{tpu_custom_call.1} parent=31 // pred_region
        %s181 = smul.u32 32, %s11
        %p182 = scmp.lt.s32.totalorder %s181, 255
        %s183 = scalar_select %p182, %s181, 255
        %s184 = smul.addr %s183, 4
        %s185 = scalar_lea.vmem %s0, %s184
        %s186 = smul.u32 32, %s11
      $region36: #{tpu_custom_call.1} parent=31 // pred_fallthru
        _
    $region32: #{tpu_custom_call.1} parent=5 // pred_fallthru
      _
    %p187 = scmp.le.s32.totalorder 1, %s11
    %p188 = scmp.lt.s32.totalorder %s11, 9
    %p189 = pnand %p187, %p188
    %p190 = pneg %p189
    // Predicated region
    $region37: #{tpu_custom_call.1} parent=5 // pred_check
      _
    $region38: #{tpu_custom_call.1} parent=5 // pred_check_branch
      %192 = sbr.rel (%p189) target = $region40
    $region39: #{tpu_custom_call.1} parent=5 // pred_region
      %s193 = ssub.s32 %s11, 1
      %s194 = smul.u32 32, %s16
      %p195 = scmp.lt.s32.totalorder %s194, 255
      %s196 = scalar_select %p195, %s194, 255
      %s197 = smul.addr %s196, 4
      %s198 = scalar_lea.vmem %s0, %s197
      %p199 = pneg %p37
      %p200 = pneg %p34
      %p201 = pneg %p58
      %p202 = pneg %p55
      %p203 = pneg %p79
      %p204 = pneg %p76
      %p205 = pneg %p100
      %p206 = pneg %p97
      %p207 = pneg %p121
      %p208 = pneg %p118
      %p209 = pneg %p147
      %p210 = pneg %p144
      %s211 = smul.u32 32, %s16
      %p212 = scmp.lt.s32.totalorder %s211, 255
      %s213 = scalar_select %p212, %s211, 255
      %s214 = smul.addr %s213, 4
      %s215 = scalar_lea.vmem %s5, %s214
      %s216 = smul.u32 32, %s16
      %p217 = scmp.lt.s32.totalorder %s216, 255
      %s218 = scalar_select %p217, %s216, 255
      %s219 = smul.addr %s218, 4
      %s220 = scalar_lea.vmem %s0, %s219
      %s221 = smul.u32 32, %s16
      %s222 = smul.u32 32, %s16
      %p223 = scmp.lt.s32.totalorder %s222, 255
      %s224 = scalar_select %p223, %s222, 255
      %s225 = smul.addr %s224, 4
      %s226 = scalar_lea.vmem %s5, %s225
      %s227 = smul.u32 32, %s16
      %v229 = vld [vmem:[%s220] sm:$0xf]
      %v230 = vld [vmem:[%s220 + $0x4] sm:$0xf]
      %v231 = vld [vmem:[%s220 + $0x8] sm:$0xf]
      %v232 = vld [vmem:[%s220 + $0xc] sm:$0xf]
      %v233 = vld [vmem:[%s220 + $0x10] sm:$0xf]
      %v234 = vld [vmem:[%s220 + $0x14] sm:$0xf]
      %v235 = vld [vmem:[%s220 + $0x18] sm:$0xf]
      %v236 = vld [vmem:[%s220 + $0x1c] sm:$0xf]
      %v237 = vld [vmem:[%s220 + $0x20] sm:$0xf]
      %v238 = vld [vmem:[%s220 + $0x24] sm:$0xf]
      %v239 = vld [vmem:[%s220 + $0x28] sm:$0xf]
      %v240 = vld [vmem:[%s220 + $0x2c] sm:$0xf]
      %v241 = vld [vmem:[%s220 + $0x30] sm:$0xf]
      %v242 = vld [vmem:[%s220 + $0x34] sm:$0xf]
      %v243 = vld [vmem:[%s220 + $0x38] sm:$0xf]
      %v244 = vld [vmem:[%s220 + $0x3c] sm:$0xf]
      %v245 = vld [vmem:[%s220 + $0x40] sm:$0xf]
      %v246 = vld [vmem:[%s220 + $0x44] sm:$0xf]
      %v247 = vld [vmem:[%s220 + $0x48] sm:$0xf]
      %v248 = vld [vmem:[%s220 + $0x4c] sm:$0xf]
      %v249 = vld [vmem:[%s220 + $0x50] sm:$0xf]
      %v250 = vld [vmem:[%s220 + $0x54] sm:$0xf]
      %v251 = vld [vmem:[%s220 + $0x58] sm:$0xf]
      %v252 = vld [vmem:[%s220 + $0x5c] sm:$0xf]
      %v253 = vld [vmem:[%s220 + $0x60] sm:$0xf]
      %v254 = vld [vmem:[%s220 + $0x64] sm:$0xf]
      %v255 = vld [vmem:[%s220 + $0x68] sm:$0xf]
      %v256 = vld [vmem:[%s220 + $0x6c] sm:$0xf]
      %v257 = vld [vmem:[%s220 + $0x70] sm:$0xf]
      %v258 = vld [vmem:[%s220 + $0x74] sm:$0xf]
      %v259 = vld [vmem:[%s220 + $0x78] sm:$0xf]
      %v260 = vld [vmem:[%s220 + $0x7c] sm:$0xf]
      %v261 = vld [vmem:[%s1] sm:$0xf]
      %v262 = vld [vmem:[%s1 + $0x4] sm:$0xf]
      %v263 = vld [vmem:[%s1 + $0x8] sm:$0xf]
      %v264 = vld [vmem:[%s1 + $0xc] sm:$0x3]
      %v297 = vunpack.c.l.b16 %v229
      %v298 = vunpack.c.l.b16 %v230
      %v299 = vunpack.c.l.b16 %v231
      %v300 = vunpack.c.l.b16 %v232
      %v301 = vunpack.c.l.b16 %v233
      %v302 = vunpack.c.l.b16 %v234
      %v303 = vunpack.c.l.b16 %v235
      %v304 = vunpack.c.l.b16 %v236
      %v305 = vunpack.c.l.b16 %v237
      %v306 = vunpack.c.l.b16 %v238
      %v307 = vunpack.c.l.b16 %v239
      %v308 = vunpack.c.l.b16 %v240
      %v309 = vunpack.c.l.b16 %v241
      %v310 = vunpack.c.l.b16 %v242
      %v311 = vunpack.c.l.b16 %v243
      %v312 = vunpack.c.l.b16 %v244
      %v313 = vunpack.c.l.b16 %v245
      %v314 = vunpack.c.l.b16 %v246
      %v315 = vunpack.c.l.b16 %v247
      %v316 = vunpack.c.l.b16 %v248
      %v317 = vunpack.c.l.b16 %v249
      %v318 = vunpack.c.l.b16 %v250
      %v319 = vunpack.c.l.b16 %v251
      %v320 = vunpack.c.l.b16 %v252
      %v321 = vunpack.c.l.b16 %v253
      %v322 = vunpack.c.l.b16 %v254
      %v323 = vunpack.c.l.b16 %v255
      %v324 = vunpack.c.l.b16 %v256
      %v325 = vunpack.c.l.b16 %v257
      %v326 = vunpack.c.l.b16 %v258
      %v327 = vunpack.c.l.b16 %v259
      %v328 = vunpack.c.l.b16 %v260
      %v329 = vpack.c.b16 %v298, %v297
      %v330 = vpack.c.b16 %v300, %v299
      %v331 = vpack.c.b16 %v302, %v301
      %v332 = vpack.c.b16 %v304, %v303
      %v333 = vpack.c.b16 %v306, %v305
      %v334 = vpack.c.b16 %v308, %v307
      %v335 = vpack.c.b16 %v310, %v309
      %v336 = vpack.c.b16 %v312, %v311
      %v337 = vpack.c.b16 %v314, %v313
      %v338 = vpack.c.b16 %v316, %v315
      %v339 = vpack.c.b16 %v318, %v317
      %v340 = vpack.c.b16 %v320, %v319
      %v341 = vpack.c.b16 %v322, %v321
      %v342 = vpack.c.b16 %v324, %v323
      %v343 = vpack.c.b16 %v326, %v325
      %v344 = vpack.c.b16 %v328, %v327
      %v349 = vunpack.c.l.b16 %v261
      %v350 = vunpack.c.l.b16 %v262
      %v351 = vunpack.c.l.b16 %v263
      %v352 = vunpack.c.l.b16 %v264
      %v353 = vpack.c.b16 %v350, %v349
      %v354 = vpack.c.b16 %v352, %v351
      %vm356 = vcmask 220160
      %v358 = vsel %vm356, %v329, 0
      %v361 = vsel %vm356, %v330, 0
      %v364 = vsel %vm356, %v331, 0
      %v367 = vsel %vm356, %v332, 0
      %v370 = vsel %vm356, %v333, 0
      %v373 = vsel %vm356, %v334, 0
      %v376 = vsel %vm356, %v335, 0
      %v379 = vsel %vm356, %v336, 0
      %v382 = vsel %vm356, %v337, 0
      %v385 = vsel %vm356, %v338, 0
      %v388 = vsel %vm356, %v339, 0
      %v391 = vsel %vm356, %v340, 0
      %v394 = vsel %vm356, %v341, 0
      %v397 = vsel %vm356, %v342, 0
      %v400 = vsel %vm356, %v343, 0
      %v403 = vsel %vm356, %v344, 0
      %vm405 = vcmask 1044480
      %vm406 = vcmask 1045504
      %v407 = vsel %vm405, 4294967295, 65535
      %v408 = vsel %vm406, %v407, 0
      %v410 = vand.u32 %v354, %v408
      %412 = vmatpush.bf16.msra.mxu0 0
      %413 = vmatpush.bf16.msra.mxu0 0
      %414 = vmatpush.bf16.msra.mxu0 0
      %415 = vmatpush.bf16.msra.mxu0 0
      %416 = vmatpush.bf16.msra.mxu0 0
      %417 = vmatpush.bf16.msra.mxu0 0
      %418 = vmatpush.bf16.msra.mxu0 %v410
      %419 = vmatpush.bf16.msra.mxu0 %v353
      %420 = vmatmul.bf16.gmra.mxu0 %v358
      %v421 = vpop.f32.mrf.mxu0
      %v422 = vadd.f32 0.0, %v421
      %v423 = vpop.f32.mrf.mxu0
      %v424 = vadd.f32 0.0, %v423
      %425 = vmatmul.bf16.gmra.mxu0 %v361
      %v426 = vpop.f32.mrf.mxu0
      %v427 = vadd.f32 0.0, %v426
      %v428 = vpop.f32.mrf.mxu0
      %v429 = vadd.f32 0.0, %v428
      %430 = vmatmul.bf16.gmra.mxu0 %v364
      %v431 = vpop.f32.mrf.mxu0
      %v432 = vadd.f32 0.0, %v431
      %v433 = vpop.f32.mrf.mxu0
      %v434 = vadd.f32 0.0, %v433
      %435 = vmatmul.bf16.gmra.mxu0 %v367
      %v436 = vpop.f32.mrf.mxu0
      %v437 = vadd.f32 0.0, %v436
      %v438 = vpop.f32.mrf.mxu0
      %v439 = vadd.f32 0.0, %v438
      %440 = vmatmul.bf16.gmra.mxu0 %v370
      %v441 = vpop.f32.mrf.mxu0
      %v442 = vadd.f32 0.0, %v441
      %v443 = vpop.f32.mrf.mxu0
      %v444 = vadd.f32 0.0, %v443
      %445 = vmatmul.bf16.gmra.mxu0 %v373
      %v446 = vpop.f32.mrf.mxu0
      %v447 = vadd.f32 0.0, %v446
      %v448 = vpop.f32.mrf.mxu0
      %v449 = vadd.f32 0.0, %v448
      %450 = vmatmul.bf16.gmra.mxu0 %v376
      %v451 = vpop.f32.mrf.mxu0
      %v452 = vadd.f32 0.0, %v451
      %v453 = vpop.f32.mrf.mxu0
      %v454 = vadd.f32 0.0, %v453
      %455 = vmatmul.bf16.gmra.mxu0 %v379
      %v456 = vpop.f32.mrf.mxu0
      %v457 = vadd.f32 0.0, %v456
      %v458 = vpop.f32.mrf.mxu0
      %v459 = vadd.f32 0.0, %v458
      %460 = vmatmul.bf16.gmra.mxu0 %v382
      %v461 = vpop.f32.mrf.mxu0
      %v462 = vadd.f32 0.0, %v461
      %v463 = vpop.f32.mrf.mxu0
      %v464 = vadd.f32 0.0, %v463
      %465 = vmatmul.bf16.gmra.mxu0 %v385
      %v466 = vpop.f32.mrf.mxu0
      %v467 = vadd.f32 0.0, %v466
      %v468 = vpop.f32.mrf.mxu0
      %v469 = vadd.f32 0.0, %v468
      %470 = vmatmul.bf16.gmra.mxu0 %v388
      %v471 = vpop.f32.mrf.mxu0
      %v472 = vadd.f32 0.0, %v471
      %v473 = vpop.f32.mrf.mxu0
      %v474 = vadd.f32 0.0, %v473
      %475 = vmatmul.bf16.gmra.mxu0 %v391
      %v476 = vpop.f32.mrf.mxu0
      %v477 = vadd.f32 0.0, %v476
      %v478 = vpop.f32.mrf.mxu0
      %v479 = vadd.f32 0.0, %v478
      %480 = vmatmul.bf16.gmra.mxu0 %v394
      %v481 = vpop.f32.mrf.mxu0
      %v482 = vadd.f32 0.0, %v481
      %v483 = vpop.f32.mrf.mxu0
      %v484 = vadd.f32 0.0, %v483
      %485 = vmatmul.bf16.gmra.mxu0 %v397
      %v486 = vpop.f32.mrf.mxu0
      %v487 = vadd.f32 0.0, %v486
      %v488 = vpop.f32.mrf.mxu0
      %v489 = vadd.f32 0.0, %v488
      %490 = vmatmul.bf16.gmra.mxu0 %v400
      %v491 = vpop.f32.mrf.mxu0
      %v492 = vadd.f32 0.0, %v491
      %v493 = vpop.f32.mrf.mxu0
      %v494 = vadd.f32 0.0, %v493
      %495 = vmatmul.bf16.gmra.mxu0 %v403
      %v496 = vpop.f32.mrf.mxu0
      %v497 = vadd.f32 0.0, %v496
      %v498 = vpop.f32.mrf.mxu0
      %v499 = vadd.f32 0.0, %v498
      %500 = vdwg.mxu0
      %v501 = vld [vmem:[%s2] sm:$0x1]
      %v503 = vperm.slane %v501, 0
      %v505 = vmul.f32 %v422, %v503
      %v506 = vmul.f32 %v424, %v503
      %v507 = vmul.f32 %v427, %v503
      %v508 = vmul.f32 %v429, %v503
      %v509 = vmul.f32 %v432, %v503
      %v510 = vmul.f32 %v434, %v503
      %v511 = vmul.f32 %v437, %v503
      %v512 = vmul.f32 %v439, %v503
      %v513 = vmul.f32 %v442, %v503
      %v514 = vmul.f32 %v444, %v503
      %v515 = vmul.f32 %v447, %v503
      %v516 = vmul.f32 %v449, %v503
      %v517 = vmul.f32 %v452, %v503
      %v518 = vmul.f32 %v454, %v503
      %v519 = vmul.f32 %v457, %v503
      %v520 = vmul.f32 %v459, %v503
      %v521 = vmul.f32 %v462, %v503
      %v522 = vmul.f32 %v464, %v503
      %v523 = vmul.f32 %v467, %v503
      %v524 = vmul.f32 %v469, %v503
      %v525 = vmul.f32 %v472, %v503
      %v526 = vmul.f32 %v474, %v503
      %v527 = vmul.f32 %v477, %v503
      %v528 = vmul.f32 %v479, %v503
      %v529 = vmul.f32 %v482, %v503
      %v530 = vmul.f32 %v484, %v503
      %v531 = vmul.f32 %v487, %v503
      %v532 = vmul.f32 %v489, %v503
      %v533 = vmul.f32 %v492, %v503
      %v534 = vmul.f32 %v494, %v503
      %v535 = vmul.f32 %v497, %v503
      %v536 = vmul.f32 %v499, %v503
      %v537 = vld [vmem:[%s3] sm:$0x1]
      %v539 = vperm.slane %v537, 0
      %v541 = vadd.f32 %v505, %v539
      %v542 = vadd.f32 %v506, %v539
      %v543 = vadd.f32 %v507, %v539
      %v544 = vadd.f32 %v508, %v539
      %v545 = vadd.f32 %v509, %v539
      %v546 = vadd.f32 %v510, %v539
      %v547 = vadd.f32 %v511, %v539
      %v548 = vadd.f32 %v512, %v539
      %v549 = vadd.f32 %v513, %v539
      %v550 = vadd.f32 %v514, %v539
      %v551 = vadd.f32 %v515, %v539
      %v552 = vadd.f32 %v516, %v539
      %v553 = vadd.f32 %v517, %v539
      %v554 = vadd.f32 %v518, %v539
      %v555 = vadd.f32 %v519, %v539
      %v556 = vadd.f32 %v520, %v539
      %v557 = vadd.f32 %v521, %v539
      %v558 = vadd.f32 %v522, %v539
      %v559 = vadd.f32 %v523, %v539
      %v560 = vadd.f32 %v524, %v539
      %v561 = vadd.f32 %v525, %v539
      %v562 = vadd.f32 %v526, %v539
      %v563 = vadd.f32 %v527, %v539
      %v564 = vadd.f32 %v528, %v539
      %v565 = vadd.f32 %v529, %v539
      %v566 = vadd.f32 %v530, %v539
      %v567 = vadd.f32 %v531, %v539
      %v568 = vadd.f32 %v532, %v539
      %v569 = vadd.f32 %v533, %v539
      %v570 = vadd.f32 %v534, %v539
      %v571 = vadd.f32 %v535, %v539
      %v572 = vadd.f32 %v536, %v539
      %v573 = vmax.f32 %v541, 0.0
      %v574 = vmax.f32 %v542, 0.0
      %v575 = vmax.f32 %v543, 0.0
      %v576 = vmax.f32 %v544, 0.0
      %v577 = vmax.f32 %v545, 0.0
      %v578 = vmax.f32 %v546, 0.0
      %v579 = vmax.f32 %v547, 0.0
      %v580 = vmax.f32 %v548, 0.0
      %v581 = vmax.f32 %v549, 0.0
      %v582 = vmax.f32 %v550, 0.0
      %v583 = vmax.f32 %v551, 0.0
      %v584 = vmax.f32 %v552, 0.0
      %v585 = vmax.f32 %v553, 0.0
      %v586 = vmax.f32 %v554, 0.0
      %v587 = vmax.f32 %v555, 0.0
      %v588 = vmax.f32 %v556, 0.0
      %v589 = vmax.f32 %v557, 0.0
      %v590 = vmax.f32 %v558, 0.0
      %v591 = vmax.f32 %v559, 0.0
      %v592 = vmax.f32 %v560, 0.0
      %v593 = vmax.f32 %v561, 0.0
      %v594 = vmax.f32 %v562, 0.0
      %v595 = vmax.f32 %v563, 0.0
      %v596 = vmax.f32 %v564, 0.0
      %v597 = vmax.f32 %v565, 0.0
      %v598 = vmax.f32 %v566, 0.0
      %v599 = vmax.f32 %v567, 0.0
      %v600 = vmax.f32 %v568, 0.0
      %v601 = vmax.f32 %v569, 0.0
      %v602 = vmax.f32 %v570, 0.0
      %v603 = vmax.f32 %v571, 0.0
      %v604 = vmax.f32 %v572, 0.0
      %v605 = vpack.c.bf16 %v573, %v573
      %v606 = vpack.c.bf16 %v574, %v574
      %v607 = vpack.c.bf16 %v575, %v575
      %v608 = vpack.c.bf16 %v576, %v576
      %v609 = vpack.c.bf16 %v577, %v577
      %v610 = vpack.c.bf16 %v578, %v578
      %v611 = vpack.c.bf16 %v579, %v579
      %v612 = vpack.c.bf16 %v580, %v580
      %v613 = vpack.c.bf16 %v581, %v581
      %v614 = vpack.c.bf16 %v582, %v582
      %v615 = vpack.c.bf16 %v583, %v583
      %v616 = vpack.c.bf16 %v584, %v584
      %v617 = vpack.c.bf16 %v585, %v585
      %v618 = vpack.c.bf16 %v586, %v586
      %v619 = vpack.c.bf16 %v587, %v587
      %v620 = vpack.c.bf16 %v588, %v588
      %v621 = vpack.c.bf16 %v589, %v589
      %v622 = vpack.c.bf16 %v590, %v590
      %v623 = vpack.c.bf16 %v591, %v591
      %v624 = vpack.c.bf16 %v592, %v592
      %v625 = vpack.c.bf16 %v593, %v593
      %v626 = vpack.c.bf16 %v594, %v594
      %v627 = vpack.c.bf16 %v595, %v595
      %v628 = vpack.c.bf16 %v596, %v596
      %v629 = vpack.c.bf16 %v597, %v597
      %v630 = vpack.c.bf16 %v598, %v598
      %v631 = vpack.c.bf16 %v599, %v599
      %v632 = vpack.c.bf16 %v600, %v600
      %v633 = vpack.c.bf16 %v601, %v601
      %v634 = vpack.c.bf16 %v602, %v602
      %v635 = vpack.c.bf16 %v603, %v603
      %v636 = vpack.c.bf16 %v604, %v604
      %vm637 = vcmask 519168
      %638 = vst.msk [vmem:[%s226] sm:$0xf] %vm637, %v605
      %639 = vst.msk [vmem:[%s226 + $0x4] sm:$0xf] %vm637, %v606
      %640 = vst.msk [vmem:[%s226 + $0x8] sm:$0xf] %vm637, %v607
      %641 = vst.msk [vmem:[%s226 + $0xc] sm:$0xf] %vm637, %v608
      %642 = vst.msk [vmem:[%s226 + $0x10] sm:$0xf] %vm637, %v609
      %643 = vst.msk [vmem:[%s226 + $0x14] sm:$0xf] %vm637, %v610
      %644 = vst.msk [vmem:[%s226 + $0x18] sm:$0xf] %vm637, %v611
      %645 = vst.msk [vmem:[%s226 + $0x1c] sm:$0xf] %vm637, %v612
      %646 = vst.msk [vmem:[%s226 + $0x20] sm:$0xf] %vm637, %v613
      %647 = vst.msk [vmem:[%s226 + $0x24] sm:$0xf] %vm637, %v614
      %648 = vst.msk [vmem:[%s226 + $0x28] sm:$0xf] %vm637, %v615
      %649 = vst.msk [vmem:[%s226 + $0x2c] sm:$0xf] %vm637, %v616
      %650 = vst.msk [vmem:[%s226 + $0x30] sm:$0xf] %vm637, %v617
      %651 = vst.msk [vmem:[%s226 + $0x34] sm:$0xf] %vm637, %v618
      %652 = vst.msk [vmem:[%s226 + $0x38] sm:$0xf] %vm637, %v619
      %653 = vst.msk [vmem:[%s226 + $0x3c] sm:$0xf] %vm637, %v620
      %654 = vst.msk [vmem:[%s226 + $0x40] sm:$0xf] %vm637, %v621
      %655 = vst.msk [vmem:[%s226 + $0x44] sm:$0xf] %vm637, %v622
      %656 = vst.msk [vmem:[%s226 + $0x48] sm:$0xf] %vm637, %v623
      %657 = vst.msk [vmem:[%s226 + $0x4c] sm:$0xf] %vm637, %v624
      %658 = vst.msk [vmem:[%s226 + $0x50] sm:$0xf] %vm637, %v625
      %659 = vst.msk [vmem:[%s226 + $0x54] sm:$0xf] %vm637, %v626
      %660 = vst.msk [vmem:[%s226 + $0x58] sm:$0xf] %vm637, %v627
      %661 = vst.msk [vmem:[%s226 + $0x5c] sm:$0xf] %vm637, %v628
      %662 = vst.msk [vmem:[%s226 + $0x60] sm:$0xf] %vm637, %v629
      %663 = vst.msk [vmem:[%s226 + $0x64] sm:$0xf] %vm637, %v630
      %664 = vst.msk [vmem:[%s226 + $0x68] sm:$0xf] %vm637, %v631
      %665 = vst.msk [vmem:[%s226 + $0x6c] sm:$0xf] %vm637, %v632
      %666 = vst.msk [vmem:[%s226 + $0x70] sm:$0xf] %vm637, %v633
      %667 = vst.msk [vmem:[%s226 + $0x74] sm:$0xf] %vm637, %v634
      %668 = vst.msk [vmem:[%s226 + $0x78] sm:$0xf] %vm637, %v635
      %669 = vst.msk [vmem:[%s226 + $0x7c] sm:$0xf] %vm637, %v636
      %s670 = smul.u32 32, %s16
      %p671 = scmp.lt.s32.totalorder %s670, 255
      %s672 = scalar_select %p671, %s670, 255
      %s673 = smul.addr %s672, 4
      %s674 = scalar_lea.vmem %s5, %s673
      // Predicated region
      $region41: #{tpu_custom_call.1} parent=39 // pred_check
        %p675 = pneg %p144
      $region42: #{tpu_custom_call.1} parent=39 // pred_check_branch
        %677 = sbr.rel (%p675) target = $region44
      $region43: #{tpu_custom_call.1} parent=39 // pred_region
        %s678 = smul.u32 32, %s16
      $region44: #{tpu_custom_call.1} parent=39 // pred_fallthru
        _
    $region40: #{tpu_custom_call.1} parent=5 // pred_fallthru
      _
    %p679 = scmp.le.s32.totalorder 2, %s11
    // Predicated region
    $region45: #{tpu_custom_call.1} parent=5 // pred_check
      %p680 = pneg %p679
    $region46: #{tpu_custom_call.1} parent=5 // pred_check_branch
      %682 = sbr.rel (%p680) target = $region48
    $region47: #{tpu_custom_call.1} parent=5 // pred_region
      %s683 = ssub.s32 %s11, 2
      // Predicated region
      $region49: #{tpu_custom_call.1} parent=47 // pred_check
        %p684 = pneg %p150
      $region50: #{tpu_custom_call.1} parent=47 // pred_check_branch
        %686 = sbr.rel (%p684) target = $region52
      $region51: #{tpu_custom_call.1} parent=47 // pred_region
        %s687 = smul.u32 32, %s17
        %p688 = scmp.lt.s32.totalorder %s687, 255
        %s689 = scalar_select %p688, %s687, 255
        %s690 = smul.addr %s689, 4
        %s691 = scalar_lea.vmem %s5, %s690
      $region52: #{tpu_custom_call.1} parent=47 // pred_fallthru
        _
    $region48: #{tpu_custom_call.1} parent=5 // pred_fallthru
      _
  $region6: #{tpu_custom_call.1} parent=0 // loop_footer
    %s15 = sadd.s32 1, %s11
  $region7: #{tpu_custom_call.1} parent=0 // loop_footer_branch
    %10 = sbr.rel target = $region3
  $region8: #{tpu_custom_call.1} parent=0 // loop_exit
    _

</llo_original>
